<compile_context>
chip_gen: v7x
topology: tpu7x:2x2x1
jax: 0.10.0
libtpu: 0.0.40
codegen_flags: <defaults>
</compile_context>

<pallas_src>
import jax
import jax.numpy as jnp
from jax import lax
from jax.experimental import pallas as pl
from jax.experimental.pallas import tpu as pltpu

# Sobel kernels, identical to the module's deterministic __init__ weights.
_WX = ((1.0, 0.0, -1.0),
       (2.0, 0.0, -2.0),
       (1.0, 0.0, -1.0))
_WY = ((1.0, 2.0, 1.0),
       (0.0, 0.0, 0.0),
       (-1.0, -2.0, -1.0))


def _build_kernel(n, nb, h, w, bpc, needs_batch_mask):
    """Kernel closure over static shape / tiling parameters."""
    use_row_roll = (h % 8 == 0)      # sublane axis
    use_col_roll = (w % 128 == 0)    # lane axis

    def shift(x, ids, axis, off, use_roll):
        """y[..., i, ...] = x[..., i+off, ...] along `axis`, zero-filled OOB."""
        size = x.shape[axis]
        if use_roll:
            if off == 1:
                y = pltpu.roll(x, size - 1, axis)        # y[i] = x[i+1] (wrap)
                return jnp.where(ids == size - 1, 0.0, y)
            y = pltpu.roll(x, 1, axis)                   # y[i] = x[i-1] (wrap)
            return jnp.where(ids == 0, 0.0, y)
        # Fallback (partial tiles): concatenate with an explicit zero slab.
        if axis == 1:
            z = jnp.zeros((x.shape[0], 1, x.shape[2]), x.dtype)
            if off == 1:
                return jnp.concatenate([x[:, 1:, :], z], axis=1)
            return jnp.concatenate([z, x[:, :size - 1, :]], axis=1)
        z = jnp.zeros((x.shape[0], x.shape[1], 1), x.dtype)
        if off == 1:
            return jnp.concatenate([x[:, :, 1:], z], axis=2)
        return jnp.concatenate([z, x[:, :, :size - 1]], axis=2)

    def kernel(pred_ref, target_ref, out_ref):
        ci = pl.program_id(0)
        bi = pl.program_id(1)

        # Output block is resident across the (arbitrary) bi axis: accumulator.
        @pl.when(bi == 0)
        def _init():
            out_ref[...] = jnp.zeros_like(out_ref)

        # Linearity: convolve the difference only; upcast to f32 on-chip so
        # HBM->VMEM DMA stays at input width.
        d = pred_ref[...].astype(jnp.float32) - target_ref[...].astype(jnp.float32)

        row_ids = lax.broadcasted_iota(jnp.int32, (nb, h, w), 1)
        col_ids = lax.broadcasted_iota(jnp.int32, (nb, h, w), 2)

        # Shared row taps (used by both Gx and Gy).
        r_up = shift(d, row_ids, 1, -1, use_row_roll)    # d[i-1, j]
        r_dn = shift(d, row_ids, 1, +1, use_row_roll)    # d[i+1, j]
        v = r_up + 2.0 * d + r_dn                        # [1,2,1] over rows
        rdiff = r_up - r_dn                              # [1,0,-1] over rows

        # Gx = [1,0,-1] over cols applied to v.
        gx = (shift(v, col_ids, 2, -1, use_col_roll)
              - shift(v, col_ids, 2, +1, use_col_roll))
        per = jnp.abs(gx)

        # Gy = [1,2,1] over cols applied to rdiff.
        gy = (shift(rdiff, col_ids, 2, -1, use_col_roll)
              + 2.0 * rdiff
              + shift(rdiff, col_ids, 2, +1, use_col_roll))
        per = per + jnp.abs(gy)

        if needs_batch_mask:
            # Ragged last block / clamped over-run blocks contribute zero.
            base = (ci * bpc + bi) * nb
            batch_ids = base + lax.broadcasted_iota(jnp.int32, (nb, h, w), 0)
            per = jnp.where(batch_ids < n, per, 0.0)

        # Reduce only over batch + row axes (no per-step cross-lane work);
        # the final lane reduce happens once in the wrapper.
        col_part = jnp.sum(jnp.sum(per, axis=0), axis=0)[None, None, :]  # (1,1,w)
        out_ref[...] += col_part

    return kernel


def _tpu_vmem_and_cores():
    """(physical VMEM bytes per TensorCore, TensorCores per chip) -- conservative."""
    kind = ""
    try:
        kind = jax.devices()[0].device_kind.lower()
    except Exception:
        pass
    is_v7 = ("v7" in kind) or ("7x" in kind)

    vmem = None
    try:
        v = getattr(pltpu.get_tpu_info(), "vmem_capacity_bytes", None)
        if isinstance(v, int) and v > 0:
            vmem = v
    except Exception:
        pass
    if vmem is None:
        # 64 MiB/TC on v7x (and as a safe default), 128 MiB on v4/v5e/v6e.
        vmem = (64 if (is_v7 or not kind) else 128) * 1024 * 1024

    cores = 2 if is_v7 else 1
    return vmem, cores


def _choose_batch_block(n, h, w, in_bytes, budget_bytes):
    """Largest batch block whose working set fits the VMEM budget."""
    # 2 inputs x 2 pipeline buffers at input width + ~8 live f32/i32 whole-tile
    # temporaries (d, r_up, r_dn / v, rdiff, shifted operand, |g| acc, iotas).
    per_image = h * w * (4 * in_bytes + 8 * 4)
    return int(max(1, min(n, budget_bytes // per_image)))


def gradient_loss(pred, target):
    """pred, target: (N, 1, H, W). Returns scalar f32 Sobel-gradient L1 loss."""
    n, c, h, w = pred.shape
    assert c == 1 and target.shape == pred.shape

    # Glue: drop the singleton channel only; keep the original dtype.
    p = pred[:, 0]
    t = target[:, 0]
    in_bytes = p.dtype.itemsize

    vmem_phys, cores = _tpu_vmem_and_cores()
    budget = (vmem_phys * 3) // 8        # ~48 MiB (128-MiB parts) / ~24 MiB (v7x)
    vmem_limit = (vmem_phys * 3) // 4    # ~96 MiB / ~48 MiB

    nb = _choose_batch_block(n, h, w, in_bytes, budget)
    num_blocks = pl.cdiv(n, nb)
    nc = cores if num_blocks >= cores else 1
    bpc = pl.cdiv(num_blocks, nc)
    needs_batch_mask = (nc * bpc * nb) > n

    kernel = _build_kernel(n, nb, h, w, bpc, needs_batch_mask)

    last_block = num_blocks - 1

    def in_map(ci, bi):
        # Clamp so fully-out-of-range steps (odd block count split over two
        # cores) re-read the last block; their contribution is masked to zero.
        return (jnp.minimum(ci * bpc + bi, last_block), 0, 0)

    cost = pl.CostEstimate(
        flops=30 * n * h * w,
        transcendentals=0,
        bytes_accessed=2 * n * h * w * in_bytes + nc * w * 4,
    )

    out = pl.pallas_call(
        kernel,
        out_shape=jax.ShapeDtypeStruct((nc, 1, w), jnp.float32),
        grid_spec=pltpu.PrefetchScalarGridSpec(
            num_scalar_prefetch=0,
            grid=(nc, bpc),
            in_specs=[
                pl.BlockSpec((nb, h, w), in_map),
                pl.BlockSpec((nb, h, w), in_map),
            ],
            out_specs=pl.BlockSpec((1, 1, w), lambda ci, bi: (ci, 0, 0)),
        ),
        compiler_params=pltpu.CompilerParams(
            dimension_semantics=("parallel", "arbitrary"),
            vmem_limit_bytes=int(vmem_limit),
        ),
        cost_estimate=cost,
    )(p, t)

    denom = jnp.float32(n * h * w)  # N * 1 * H * W per L1Loss mean
    return jnp.sum(out) / denom


def _gradient_loss_ref(pred, target):
    """Pure-JAX reference replicating the PyTorch forward (direct 3x3 taps)."""
    wx = jnp.array(_WX, jnp.float32)
    wy = jnp.array(_WY, jnp.float32)

    def conv(x, wgt):
        xp = jnp.pad(x[:, 0].astype(jnp.float32), ((0, 0), (1, 1), (1, 1)))
        H, W = x.shape[2], x.shape[3]
        out = jnp.zeros((x.shape[0], H, W), jnp.float32)
        for di in range(3):
            for dj in range(3):
                out = out + wgt[di, dj] * xp[:, di:di + H, dj:dj + W]
        return out

    px, py = conv(pred, wx), conv(pred, wy)
    tx, ty = conv(target, wx), conv(target, wy)
    return jnp.mean(jnp.abs(px - tx)) + jnp.mean(jnp.abs(py - ty))


if __name__ == "__main__":
    def _run_case(case_key, shape):
        k1, k2 = jax.random.split(case_key)
        pred = jax.random.normal(k1, shape, dtype=jnp.float32)
        target = jax.random.normal(k2, shape, dtype=jnp.float32)
        loss = jax.block_until_ready(gradient_loss(pred, target))
        ref = jax.block_until_ready(_gradient_loss_ref(pred, target))
        assert jnp.allclose(loss, ref, rtol=1e-5, atol=1e-5), (shape, loss, ref)

    key = jax.random.PRNGKey(0)
    ka, kb = jax.random.split(key)
    _run_case(ka, (2, 1, 16, 16))    # small case (concat fallback on lane axis)
    _run_case(kb, (2, 1, 16, 128))   # lane-dense case (pltpu.roll on both axes)
    print("KERNEL_OK")
</pallas_src>

<mosaic_0001>
module attributes {stable_mosaic.version = 11 : i64} {
  func.func @kernel(%arg0: i32, %arg1: i32, %arg2: memref<2x16x16xf32, #tpu.memory_space<vmem>>, %arg3: memref<2x16x16xf32, #tpu.memory_space<vmem>>, %arg4: memref<1x1x16xf32, #tpu.memory_space<vmem>>) attributes {dimension_semantics = [#tpu.dimension_semantics<parallel>, #tpu.dimension_semantics<arbitrary>], iteration_bounds = array<i64: 1, 1>, scalar_prefetch = 0 : i64, scratch_operands = 0 : i64, tpu.core_type = #tpu.core_type<tc>, window_params = [{transform_indices = @transform_0, window_bounds = array<i64: 2, 16, 16>}, {transform_indices = @transform_1, window_bounds = array<i64: 2, 16, 16>}, {transform_indices = @transform_2, window_bounds = array<i64: 1, 1, 16>}]} {
    %c0_i32 = arith.constant 0 : i32
    %0 = arith.cmpi eq, %arg1, %c0_i32 : i32
    %1 = arith.extui %0 : i1 to i32
    %c0_i32_0 = arith.constant 0 : i32
    %2 = arith.cmpi ne, %1, %c0_i32_0 : i32
    scf.if %2 {
      %cst_23 = arith.constant 0.000000e+00 : f32
      %48 = vector.broadcast %cst_23 : f32 to vector<1x1x16xf32>
      %c0_24 = arith.constant 0 : index
      %c0_25 = arith.constant 0 : index
      %c0_26 = arith.constant 0 : index
      %49 = vector.load %arg4[%c0_24, %c0_25, %c0_26] : memref<1x1x16xf32, #tpu.memory_space<vmem>>, vector<1x1x16xf32>
      tpu.vector_store %arg4[%c0_24, %c0_25, %c0_26], %48 {strides = array<i32>} : memref<1x1x16xf32, #tpu.memory_space<vmem>>, vector<1x1x16xf32>,
    } else {
    }
    %c0 = arith.constant 0 : index
    %c0_1 = arith.constant 0 : index
    %c0_2 = arith.constant 0 : index
    %3 = vector.load %arg2[%c0, %c0_1, %c0_2] : memref<2x16x16xf32, #tpu.memory_space<vmem>>, vector<2x16x16xf32>
    %c0_3 = arith.constant 0 : index
    %c0_4 = arith.constant 0 : index
    %c0_5 = arith.constant 0 : index
    %4 = vector.load %arg3[%c0_3, %c0_4, %c0_5] : memref<2x16x16xf32, #tpu.memory_space<vmem>>, vector<2x16x16xf32>
    %5 = arith.subf %3, %4 : vector<2x16x16xf32>
    %6 = tpu.iota {dimensions = array<i32: 1>} : vector<2x16x16xi32>
    %c1_i32 = arith.constant 1 : i32
    %7 = tpu.dynamic_rotate %5 by %c1_i32 dim 1 : vector<2x16x16xf32>, i32 -> vector<2x16x16xf32>
    %c0_i32_6 = arith.constant 0 : i32
    %8 = vector.broadcast %c0_i32_6 : i32 to vector<2x16x16xi32>
    %9 = arith.cmpi eq, %6, %8 : vector<2x16x16xi32>
    %cst = arith.constant 0.000000e+00 : f32
    %10 = vector.broadcast %cst : f32 to vector<2x16x16xf32>
    %11 = arith.select %9, %10, %7 : vector<2x16x16xi1>, vector<2x16x16xf32>
    %c15_i32 = arith.constant 15 : i32
    %12 = tpu.dynamic_rotate %5 by %c15_i32 dim 1 : vector<2x16x16xf32>, i32 -> vector<2x16x16xf32>
    %c15_i32_7 = arith.constant 15 : i32
    %13 = vector.broadcast %c15_i32_7 : i32 to vector<2x16x16xi32>
    %14 = arith.cmpi eq, %6, %13 : vector<2x16x16xi32>
    %cst_8 = arith.constant 0.000000e+00 : f32
    %15 = vector.broadcast %cst_8 : f32 to vector<2x16x16xf32>
    %16 = arith.select %14, %15, %12 : vector<2x16x16xi1>, vector<2x16x16xf32>
    %cst_9 = arith.constant 2.000000e+00 : f32
    %17 = vector.broadcast %cst_9 : f32 to vector<2x16x16xf32>
    %18 = arith.mulf %17, %5 : vector<2x16x16xf32>
    %19 = arith.addf %11, %18 : vector<2x16x16xf32>
    %20 = arith.addf %19, %16 : vector<2x16x16xf32>
    %21 = arith.subf %11, %16 : vector<2x16x16xf32>
    %cst_10 = arith.constant 0.000000e+00 : f32
    %22 = vector.broadcast %cst_10 : f32 to vector<2x16x1xf32>
    %23 = vector.extract_strided_slice %20 {offsets = [0, 0, 0], sizes = [2, 16, 15], strides = [1, 1, 1]} : vector<2x16x16xf32> to vector<2x16x15xf32>
    %24 = tpu.concatenate %22, %23 in 2 : vector<2x16x1xf32>, vector<2x16x15xf32> -> vector<2x16x16xf32>
    %cst_11 = arith.constant 0.000000e+00 : f32
    %25 = vector.broadcast %cst_11 : f32 to vector<2x16x1xf32>
    %26 = vector.extract_strided_slice %20 {offsets = [0, 0, 1], sizes = [2, 16, 15], strides = [1, 1, 1]} : vector<2x16x16xf32> to vector<2x16x15xf32>
    %27 = tpu.concatenate %26, %25 in 2 : vector<2x16x15xf32>, vector<2x16x1xf32> -> vector<2x16x16xf32>
    %28 = arith.subf %24, %27 : vector<2x16x16xf32>
    %29 = math.absf %28 : vector<2x16x16xf32>
    %cst_12 = arith.constant 0.000000e+00 : f32
    %30 = vector.broadcast %cst_12 : f32 to vector<2x16x1xf32>
    %31 = vector.extract_strided_slice %21 {offsets = [0, 0, 0], sizes = [2, 16, 15], strides = [1, 1, 1]} : vector<2x16x16xf32> to vector<2x16x15xf32>
    %32 = tpu.concatenate %30, %31 in 2 : vector<2x16x1xf32>, vector<2x16x15xf32> -> vector<2x16x16xf32>
    %cst_13 = arith.constant 2.000000e+00 : f32
    %33 = vector.broadcast %cst_13 : f32 to vector<2x16x16xf32>
    %34 = arith.mulf %33, %21 : vector<2x16x16xf32>
    %35 = arith.addf %32, %34 : vector<2x16x16xf32>
    %cst_14 = arith.constant 0.000000e+00 : f32
    %36 = vector.broadcast %cst_14 : f32 to vector<2x16x1xf32>
    %37 = vector.extract_strided_slice %21 {offsets = [0, 0, 1], sizes = [2, 16, 15], strides = [1, 1, 1]} : vector<2x16x16xf32> to vector<2x16x15xf32>
    %38 = tpu.concatenate %37, %36 in 2 : vector<2x16x15xf32>, vector<2x16x1xf32> -> vector<2x16x16xf32>
    %39 = arith.addf %35, %38 : vector<2x16x16xf32>
    %40 = math.absf %39 : vector<2x16x16xf32>
    %41 = arith.addf %29, %40 : vector<2x16x16xf32>
    %cst_15 = arith.constant dense<0.000000e+00> : vector<16x16xf32>
    %42 = vector.multi_reduction <add>, %41, %cst_15 [0] : vector<2x16x16xf32> to vector<16x16xf32>
    %cst_16 = arith.constant dense<0.000000e+00> : vector<16xf32>
    %43 = vector.multi_reduction <add>, %42, %cst_16 [0] : vector<16x16xf32> to vector<16xf32>
    %44 = vector.shape_cast %43 : vector<16xf32> to vector<1x1x16xf32>
    %c0_17 = arith.constant 0 : index
    %c0_18 = arith.constant 0 : index
    %c0_19 = arith.constant 0 : index
    %45 = vector.load %arg4[%c0_17, %c0_18, %c0_19] : memref<1x1x16xf32, #tpu.memory_space<vmem>>, vector<1x1x16xf32>
    %46 = arith.addf %45, %44 : vector<1x1x16xf32>
    %c0_20 = arith.constant 0 : index
    %c0_21 = arith.constant 0 : index
    %c0_22 = arith.constant 0 : index
    %47 = vector.load %arg4[%c0_20, %c0_21, %c0_22] : memref<1x1x16xf32, #tpu.memory_space<vmem>>, vector<1x1x16xf32>
    tpu.vector_store %arg4[%c0_20, %c0_21, %c0_22], %46 {strides = array<i32>} : memref<1x1x16xf32, #tpu.memory_space<vmem>>, vector<1x1x16xf32>,
    return
  }
  func.func @transform_0(%arg0: i32, %arg1: i32) -> (i32, i32, i32) {
    %c1_i32 = arith.constant 1 : i32
    %0 = arith.muli %arg0, %c1_i32 : i32
    %1 = arith.addi %0, %arg1 : i32
    %c0_i32 = arith.constant 0 : i32
    %2 = arith.minsi %1, %c0_i32 : i32
    %c0_i32_0 = arith.constant 0 : i32
    %c0_i32_1 = arith.constant 0 : i32
    %c0_i32_2 = arith.constant 0 : i32
    return %2, %c0_i32_0, %c0_i32_1 : i32, i32, i32
  }
  func.func @transform_1(%arg0: i32, %arg1: i32) -> (i32, i32, i32) {
    %c1_i32 = arith.constant 1 : i32
    %0 = arith.muli %arg0, %c1_i32 : i32
    %1 = arith.addi %0, %arg1 : i32
    %c0_i32 = arith.constant 0 : i32
    %2 = arith.minsi %1, %c0_i32 : i32
    %c0_i32_0 = arith.constant 0 : i32
    %c0_i32_1 = arith.constant 0 : i32
    %c0_i32_2 = arith.constant 0 : i32
    return %2, %c0_i32_0, %c0_i32_1 : i32, i32, i32
  }
  func.func @transform_2(%arg0: i32, %arg1: i32) -> (i32, i32, i32) {
    %c0_i32 = arith.constant 0 : i32
    %c0_i32_0 = arith.constant 0 : i32
    %c0_i32_1 = arith.constant 0 : i32
    return %arg0, %c0_i32, %c0_i32_0 : i32, i32, i32
  }
}

</mosaic_0001>

<llo_original>
// kernel: tpu_custom_call.1
$region0: #{tpu_custom_call.1}
  #allocation0 [shape = 'u32[]', space=smem, size = 0x4, offset = 0x4, fixed_abs, tag = 'smem constant byte address 0x4 - core index']
  #allocation1 [shape = 'u32[144,128]{1,0:T(1,128)}', space=vmem, size = 0x12000, scoped, tag = 'internal scratch']
  %s0 = inlined_call_operand.hbm [shape: f32[2,16,16], index: 0, kind: input, shape index: {}]
  %s1 = inlined_call_operand.hbm [shape: f32[2,16,16], index: 1, kind: input, shape index: {}]
  %s2 = inlined_call_operand.hbm [shape: f32[1,1,16], index: 2, kind: output, shape index: {}]
  %s3 = sld [smem:[#allocation0]]
  $region30: #{tpu_custom_call.1} parent=0
    _
  %s5 = ssub.s32 1, %s3
  %s6 = scalar_select 0, %s5, %s3
  $region1: #{tpu_custom_call.1} parent=0
    #allocation2 [shape = 'u8[16384]{0}', space=vmem, size = 0x4000, scoped, tag = 'input window, operand 0, single buffered']
    #allocation3 [shape = 's32[1]{0}', space=sflag, size = 0x4, scoped, tag = 'scoped memory for tpu_custom_call.1']
    #allocation4 [shape = 's32[1]{0}', space=sflag, size = 0x4, scoped, tag = 'scoped memory for tpu_custom_call.1']
    #allocation5 [shape = 'u8[16384]{0}', space=vmem, size = 0x4000, scoped, tag = 'input window, operand 1, single buffered']
    #allocation6 [shape = 's32[1]{0}', space=sflag, size = 0x4, scoped, tag = 'scoped memory for tpu_custom_call.1']
    #allocation7 [shape = 'u8[512]{0}', space=vmem, size = 0x400, scoped, tag = 'output window, operand 0, single buffered']
    %7 = vsyncpa [#allocation3], 0
    %8 = vsyncpa [#allocation6], 0
    %9 = vsyncpa [#allocation4], 0
    // Predicated region
    $region2: #{tpu_custom_call.1} parent=1 // pred_check
      _
    $region3: #{tpu_custom_call.1} parent=1 // pred_check_branch
      %11 = sbr.rel (0) target = $region5
    $region4: #{tpu_custom_call.1} parent=1 // pred_region
      %s12 = sadd.s32 0, 0
      %p13 = scmp.lt.s32.totalorder %s12, 0
      %s14 = scalar_select %p13, %s12, 0
      %s15 = smul.u32 2, %s14
      %s17 = ssub.s32 512, 512
      %18 = vsyncadd [#allocation3], %s17
      %s19 = smul.addr %s15, 2
      %s20 = smul.addr %s19, 128
      %s21 = scalar_lea.hbm %s0, %s20
      %s22 = sshll.u32 [#allocation2], 4
      %s23 = int_to_ptr.vmem [resolvable:$true] %s22
      %28 = dma.hbm_to_vmem [thread:$0]  %s21, 512, %s23, [#allocation3], 128, 128, 8
    $region5: #{tpu_custom_call.1} parent=1 // pred_fallthru
      _
    // Predicated region
    $region6: #{tpu_custom_call.1} parent=1 // pred_check
      _
    $region7: #{tpu_custom_call.1} parent=1 // pred_check_branch
      %30 = sbr.rel (0) target = $region9
    $region8: #{tpu_custom_call.1} parent=1 // pred_region
      %s31 = sadd.s32 0, 0
      %p32 = scmp.lt.s32.totalorder %s31, 0
      %s33 = scalar_select %p32, %s31, 0
      %s34 = smul.u32 2, %s33
      %s36 = ssub.s32 512, 512
      %37 = vsyncadd [#allocation6], %s36
      %s38 = smul.addr %s34, 2
      %s39 = smul.addr %s38, 128
      %s40 = scalar_lea.hbm %s1, %s39
      %s41 = sshll.u32 [#allocation5], 4
      %s42 = int_to_ptr.vmem [resolvable:$true] %s41
      %47 = dma.hbm_to_vmem [thread:$0]  %s40, 512, %s42, [#allocation6], 128, 128, 8
    $region9: #{tpu_custom_call.1} parent=1 // pred_fallthru
      _
    // Predicated region
    $region10: #{tpu_custom_call.1} parent=1 // pred_check
      _
    $region11: #{tpu_custom_call.1} parent=1 // pred_check_branch
      %49 = sbr.rel (0) target = $region13
    $region12: #{tpu_custom_call.1} parent=1 // pred_region
      %50 = dma.done [#allocation3], 512
    $region13: #{tpu_custom_call.1} parent=1 // pred_fallthru
      _
    // Predicated region
    $region14: #{tpu_custom_call.1} parent=1 // pred_check
      _
    $region15: #{tpu_custom_call.1} parent=1 // pred_check_branch
      %52 = sbr.rel (0) target = $region17
    $region16: #{tpu_custom_call.1} parent=1 // pred_region
      %53 = dma.done [#allocation6], 512
    $region17: #{tpu_custom_call.1} parent=1 // pred_fallthru
      _
    %s54 = sadd.s32 0, 0
    %p55 = scmp.lt.s32.totalorder %s54, 0
    %s56 = scalar_select %p55, %s54, 0
    %s57 = smul.u32 2, %s56
    %s58 = sadd.s32 0, 0
    %p59 = scmp.lt.s32.totalorder %s58, 0
    %s60 = scalar_select %p59, %s58, 0
    %s61 = smul.u32 2, %s60
    %p62 = scmp.eq.s32.totalorder 0, 0
    // Predicated region
    $region18: #{tpu_custom_call.1} parent=1 // pred_check
      %p63 = pneg %p62
    $region19: #{tpu_custom_call.1} parent=1 // pred_check_branch
      %65 = sbr.rel (%p63) target = $region21
    $region20: #{tpu_custom_call.1} parent=1 // pred_region
      %vm66 = vcmask 122880
      %67 = vst.msk [vmem:[#allocation7] sm:$0x1] %vm66, 0.0
    $region21: #{tpu_custom_call.1} parent=1 // pred_fallthru
      _
    %v68 = vld [vmem:[#allocation2] sm:$0xff]
    %v69 = vld [vmem:[#allocation2 + $0x8] sm:$0xff]
    %v70 = vld [vmem:[#allocation2 + $0x10] sm:$0xff]
    %v71 = vld [vmem:[#allocation2 + $0x18] sm:$0xff]
    %v72 = vld [vmem:[#allocation5] sm:$0xff]
    %v73 = vld [vmem:[#allocation5 + $0x8] sm:$0xff]
    %v74 = vld [vmem:[#allocation5 + $0x10] sm:$0xff]
    %v75 = vld [vmem:[#allocation5 + $0x18] sm:$0xff]
    %v76 = vsub.f32 %v68, %v72
    %v77 = vsub.f32 %v69, %v73
    %v78 = vsub.f32 %v70, %v74
    %v79 = vsub.f32 %v71, %v75
    %v80 = vlaneseq
    %v81 = vshrl.u32 %v80, 7
    %v82 = vadd.s32 %v81, 8
    %v83 = vrot.slane %v76, 7
    %v84 = vrot.slane %v78, 7
    %v85 = vrot.slane %v77, 7
    %v86 = vrot.slane %v79, 7
    %vm87 = vcmp.lt.s32.totalorder %v81, 1
    %v88 = vsel %vm87, %v83, %v85
    %v89 = vsel %vm87, %v84, %v86
    %v90 = vsel %vm87, %v85, %v83
    %v91 = vsel %vm87, %v86, %v84
    %vm92 = vcmp.eq.s32.totalorder %v81, 0
    %vm93 = vcmp.eq.s32.totalorder %v82, 0
    %v94 = vsel %vm92, 0.0, %v90
    %v95 = vsel %vm93, 0.0, %v88
    %v96 = vsel %vm92, 0.0, %v91
    %v97 = vsel %vm93, 0.0, %v89
    %v98 = vrot.slane %v76, 1
    %v99 = vrot.slane %v78, 1
    %v100 = vrot.slane %v77, 1
    %v101 = vrot.slane %v79, 1
    %vm102 = vcmp.lt.s32.totalorder %v81, 7
    %v103 = vsel %vm102, %v98, %v100
    %v104 = vsel %vm102, %v99, %v101
    %v105 = vsel %vm102, %v100, %v98
    %v106 = vsel %vm102, %v101, %v99
    %vm107 = vcmp.eq.s32.totalorder %v81, 15
    %vm108 = vcmp.eq.s32.totalorder %v82, 15
    %v109 = vsel %vm107, 0.0, %v103
    %v110 = vsel %vm108, 0.0, %v105
    %v111 = vsel %vm107, 0.0, %v104
    %v112 = vsel %vm108, 0.0, %v106
    %v113 = vmul.f32 %v76, 2.0
    %v114 = vmul.f32 %v77, 2.0
    %v115 = vmul.f32 %v78, 2.0
    %v116 = vmul.f32 %v79, 2.0
    %v117 = vadd.f32 %v94, %v113
    %v118 = vadd.f32 %v95, %v114
    %v119 = vadd.f32 %v96, %v115
    %v120 = vadd.f32 %v97, %v116
    %v121 = vadd.f32 %v117, %v109
    %v122 = vadd.f32 %v118, %v110
    %v123 = vadd.f32 %v119, %v111
    %v124 = vadd.f32 %v120, %v112
    %v125 = vsub.f32 %v94, %v109
    %v126 = vsub.f32 %v95, %v110
    %v127 = vsub.f32 %v96, %v111
    %v128 = vsub.f32 %v97, %v112
    %133 = vrot.lane.b32.xlu0 %v121, 1
    %v134 = vpop.permute.xlu0 %133
    %135 = vrot.lane.b32.xlu0 %v122, 1
    %v136 = vpop.permute.xlu0 %135
    %137 = vrot.lane.b32.xlu0 %v123, 1
    %v138 = vpop.permute.xlu0 %137
    %139 = vrot.lane.b32.xlu0 %v124, 1
    %v140 = vpop.permute.xlu0 %139
    %vm145 = vcmask 7168
    %v146 = vsel %vm145, 0.0, %v134
    %v147 = vsel %vm145, 0.0, %v136
    %v148 = vsel %vm145, 0.0, %v138
    %v149 = vsel %vm145, 0.0, %v140
    %150 = vrot.lane.b32.xlu0 %v121, 127
    %v151 = vpop.permute.xlu0 %150
    %152 = vrot.lane.b32.xlu0 %v122, 127
    %v153 = vpop.permute.xlu0 %152
    %154 = vrot.lane.b32.xlu0 %v123, 127
    %v155 = vpop.permute.xlu0 %154
    %156 = vrot.lane.b32.xlu0 %v124, 127
    %v157 = vpop.permute.xlu0 %156
    %vm162 = vcmask 121856
    %v163 = vsel %vm162, %v151, 0.0
    %v164 = vsel %vm162, %v153, 0.0
    %v165 = vsel %vm162, %v155, 0.0
    %v166 = vsel %vm162, %v157, 0.0
    %v167 = vsub.f32 %v146, %v163
    %v168 = vsub.f32 %v147, %v164
    %v169 = vsub.f32 %v148, %v165
    %v170 = vsub.f32 %v149, %v166
    %v171 = vand.u32 2147483647, %v167
    %v172 = vand.u32 2147483647, %v168
    %v173 = vand.u32 2147483647, %v169
    %v174 = vand.u32 2147483647, %v170
    %179 = vrot.lane.b32.xlu0 %v125, 1
    %v180 = vpop.permute.xlu0 %179
    %181 = vrot.lane.b32.xlu0 %v126, 1
    %v182 = vpop.permute.xlu0 %181
    %183 = vrot.lane.b32.xlu0 %v127, 1
    %v184 = vpop.permute.xlu0 %183
    %185 = vrot.lane.b32.xlu0 %v128, 1
    %v186 = vpop.permute.xlu0 %185
    %v191 = vsel %vm145, 0.0, %v180
    %v192 = vsel %vm145, 0.0, %v182
    %v193 = vsel %vm145, 0.0, %v184
    %v194 = vsel %vm145, 0.0, %v186
    %v195 = vmul.f32 %v125, 2.0
    %v196 = vmul.f32 %v126, 2.0
    %v197 = vmul.f32 %v127, 2.0
    %v198 = vmul.f32 %v128, 2.0
    %v199 = vadd.f32 %v191, %v195
    %v200 = vadd.f32 %v192, %v196
    %v201 = vadd.f32 %v193, %v197
    %v202 = vadd.f32 %v194, %v198
    %203 = vrot.lane.b32.xlu0 %v125, 127
    %v204 = vpop.permute.xlu0 %203
    %205 = vrot.lane.b32.xlu0 %v126, 127
    %v206 = vpop.permute.xlu0 %205
    %207 = vrot.lane.b32.xlu0 %v127, 127
    %v208 = vpop.permute.xlu0 %207
    %209 = vrot.lane.b32.xlu0 %v128, 127
    %v210 = vpop.permute.xlu0 %209
    %v215 = vsel %vm162, %v204, 0.0
    %v216 = vsel %vm162, %v206, 0.0
    %v217 = vsel %vm162, %v208, 0.0
    %v218 = vsel %vm162, %v210, 0.0
    %v219 = vadd.f32 %v199, %v215
    %v220 = vadd.f32 %v200, %v216
    %v221 = vadd.f32 %v201, %v217
    %v222 = vadd.f32 %v202, %v218
    %v223 = vand.u32 2147483647, %v219
    %v224 = vand.u32 2147483647, %v220
    %v225 = vand.u32 2147483647, %v221
    %v226 = vand.u32 2147483647, %v222
    %v227 = vadd.f32 %v171, %v223
    %v228 = vadd.f32 %v172, %v224
    %v229 = vadd.f32 %v173, %v225
    %v230 = vadd.f32 %v174, %v226
    %vm231 = vcmask 130048
    %v232 = vsel %vm231, %v227, 0.0
    %v233 = vsel %vm231, %v229, 0.0
    %v234 = vadd.f32 %v232, %v233
    %v235 = vsel %vm231, %v228, 0.0
    %v236 = vsel %vm231, %v230, 0.0
    %v237 = vadd.f32 %v235, %v236
    %v238 = vsel %vm231, %v234, 0.0
    %v239 = vsel %vm231, %v237, 0.0
    %v240 = vadd.f32 %v238, %v239
    %v241 = vrot.slane %v240, 4
    %v242 = vadd.f32 %v240, %v241
    %v243 = vrot.slane %v242, 2
    %v244 = vadd.f32 %v242, %v243
    %v245 = vrot.slane %v244, 1
    %v246 = vadd.f32 %v244, %v245
    %v247 = vld [vmem:[#allocation7] sm:$0x1]
    %v248 = vadd.f32 %v247, %v246
    %vm249 = vcmask 122880
    %250 = vst.msk [vmem:[#allocation7] sm:$0x1] %vm249, %v248
    // Predicated region
    $region22: #{tpu_custom_call.1} parent=1 // pred_check
      _
    $region23: #{tpu_custom_call.1} parent=1 // pred_check_branch
      %252 = sbr.rel (0) target = $region25
    $region24: #{tpu_custom_call.1} parent=1 // pred_region
      %s254 = ssub.s32 16, 16
      %255 = vsyncadd [#allocation4], %s254
      %s257 = sshll.u32 [#allocation7], 4
      %s258 = int_to_ptr.vmem [resolvable:$true] %s257
      %260 = dma.vmem_to_hbm [thread:$0]  %s258, 16, %s2, [#allocation4]
    $region25: #{tpu_custom_call.1} parent=1 // pred_fallthru
      _
    // Predicated region
    $region26: #{tpu_custom_call.1} parent=1 // pred_check
      _
    $region27: #{tpu_custom_call.1} parent=1 // pred_check_branch
      %262 = sbr.rel (0) target = $region29
    $region28: #{tpu_custom_call.1} parent=1 // pred_region
      %263 = dma.done [#allocation4], 16
    $region29: #{tpu_custom_call.1} parent=1 // pred_fallthru
      _
    %264 = vsyncpa [#allocation3], 1
    %265 = vsyncpa [#allocation6], 1
    %266 = vsyncpa [#allocation4], 1

</llo_original>
